<compile_context>
chip_gen: v5e
topology: v5e:2x2
jax: 0.10.0
libtpu: 0.0.40
codegen_flags: <defaults>
</compile_context>

<pallas_src>
import functools
import math

import jax
import jax.numpy as jnp
from jax.experimental import pallas as pl
from jax.experimental.pallas import tpu as pltpu


def _round_up(x, m):
    return ((x + m - 1) // m) * m


def _mxu_level_dtype(bits):
    """Narrowest MXU operand dtype that holds all DFXP quant levels exactly."""
    if bits > 8:
        return jnp.float32          # levels need > 8 significand bits
    try:
        kind = jax.devices()[0].device_kind.lower()
    except Exception:
        kind = ""
    # v5*/v6* MXUs have an int8 datapath (~2x bf16 throughput, 1/2 the DMA of
    # bf16).  v7x has no integer MXU (and fp8 is inexact for 8-bit DFXP
    # levels) -> bf16, which is exact for |level| <= 128.
    if ("v5" in kind or "v6" in kind) and "v7" not in kind:
        return jnp.int8
    return jnp.bfloat16


def _conv_q_kernel(x_ref, w_ref, b_ref, o_ref, *, scale, int_path, f32_path):
    # grid = (M/tm, OC/tn, K/tk); K is the reduction ("arbitrary") axis.
    #   x_ref : (tm, tk)  activation quant levels (int8 / bf16 / f32)
    #   w_ref : (tk, tn)  weight quant levels (same dtype)
    #   b_ref : (1,  tn)  pre-quantized bias (f32, real units)
    #   o_ref : (tm, tn)  f32 output block; doubles as accumulator across K
    k = pl.program_id(2)

    @pl.when(k == 0)
    def _():
        o_ref[...] = jnp.zeros_like(o_ref)

    if int_path:
        part = jnp.dot(x_ref[...], w_ref[...],
                       preferred_element_type=jnp.int32).astype(jnp.float32)
    elif f32_path:
        part = jnp.dot(x_ref[...], w_ref[...],
                       preferred_element_type=jnp.float32,
                       precision=jax.lax.Precision.HIGHEST)
    else:  # bf16 levels
        part = jnp.dot(x_ref[...], w_ref[...],
                       preferred_element_type=jnp.float32)
    o_ref[...] += part

    @pl.when(k == pl.num_programs(2) - 1)
    def _():
        # Dequant scale (step*step) + quantized bias, applied once per output.
        o_ref[...] = o_ref[...] * scale + b_ref[...]


def _im2col(x, kh, kw, stride, padding):
    """x: (N, C, H, W) -> patches (N*OH*OW, C*KH*KW), matching OIHW weight flatten."""
    n, c, h, w = x.shape
    sh, sw = stride
    ph, pw = padding
    x = jnp.pad(x, ((0, 0), (0, 0), (ph, ph), (pw, pw)))
    oh = (h + 2 * ph - kh) // sh + 1
    ow = (w + 2 * pw - kw) // sw + 1
    cols = []
    for i in range(kh):
        for j in range(kw):
            cols.append(x[:, :, i:i + sh * oh:sh, j:j + sw * ow:sw])  # (N,C,OH,OW)
    p = jnp.stack(cols, axis=2)                      # (N, C, KH*KW, OH, OW)
    p = p.reshape(n, c * kh * kw, oh, ow)            # C outer, (kh,kw) inner == OIHW flatten
    p = p.transpose(0, 2, 3, 1).reshape(n * oh * ow, c * kh * kw)
    return p, oh, ow


@functools.partial(jax.jit, static_argnames=("bits", "step", "stride",
                                             "padding", "tm_max"))
def conv2d_q_forward(x, weight, bias, *, bits=8, step=2.0 ** (-5),
                     stride=(1, 1), padding=(0, 0), tm_max=512):
    """Quantized conv2d forward.  x: (N,C,H,W) f32, weight: (OC,C,KH,KW), bias: (OC,)."""
    qmin = -(2.0 ** (bits - 1))
    qmax = 2.0 ** (bits - 1) - 1.0
    quantize = bits < 32

    # x * (1/step) is exact only for power-of-two step; use a divide otherwise.
    mant, _ = math.frexp(step)
    if mant == 0.5:
        inv_step = 1.0 / step
        to_lvl = lambda t: jnp.clip(jnp.round(t * inv_step), qmin, qmax)
    else:
        to_lvl = lambda t: jnp.clip(jnp.round(t / step), qmin, qmax)

    n, c, _, _ = x.shape
    oc, _, kh, kw = weight.shape

    lvl_dtype = _mxu_level_dtype(bits)
    xb = jnp.dtype(lvl_dtype).itemsize

    # ---- hoisted quantization (wrapper-side, on NCHW, BEFORE im2col) ----
    # Store pure integer quant levels in the narrow dtype; the step*step
    # dequant scale is applied once at the kernel finalize (exact for pow2
    # step; levels are exact in int8/bf16 for bits <= 8).
    if quantize:
        x_lvl = to_lvl(x).astype(lvl_dtype)
        w_lvl = to_lvl(weight).astype(lvl_dtype)
        b_q = (to_lvl(bias) * step).astype(jnp.float32)
        scale = step * step
    else:  # bits == 32: identity quantizers
        x_lvl = x.astype(lvl_dtype)
        w_lvl = weight.astype(lvl_dtype)
        b_q = bias.astype(jnp.float32)
        scale = 1.0

    patches, oh, ow = _im2col(x_lvl, kh, kw, stride, padding)   # (M, K) narrow dtype
    m, k = patches.shape
    w_mat = w_lvl.reshape(oc, c * kh * kw).T                    # (K, OC), OIHW flatten

    # ---- tiling: lane-dense OC/K, large M tile, bounded VMEM ----
    oc_pad = _round_up(oc, 128)
    k_pad128 = _round_up(k, 128)
    m_pad128 = _round_up(m, 128)

    # Big M tile (amortize per-step overhead) but keep >= 2 tiles when possible
    # so the "parallel" M axis can split across v7x's two TensorCores.
    tm = min(tm_max, m_pad128)
    if m_pad128 // tm < 2 and m_pad128 >= 256:
        tm = max(128, (m_pad128 // 256) * 128)
    m_pad = _round_up(m, tm)

    def footprint(tk_, tn_):
        # double-buffered x/w/bias inputs + output block (f32)
        return 2 * (tm * tk_ * xb + tk_ * tn_ * xb + tm * tn_ * 4 + tn_ * 4)

    # Weight-resident path: whole (K, OC) weight as a single block (its block
    # index is constant over the grid, so it is DMA'd once and stays in VMEM).
    if footprint(k_pad128, oc_pad) <= (24 << 20):
        tk, tn = k_pad128, oc_pad
    else:
        tn = 512 if oc_pad % 512 == 0 else (256 if oc_pad % 256 == 0 else 128)
        n_k = -(-k_pad128 // 2048)                   # ~2048-wide K steps
        tk = _round_up(-(-k_pad128 // n_k), 128)
    k_pad = _round_up(k_pad128, tk)

    patches = jnp.pad(patches, ((0, m_pad - m), (0, k_pad - k)))
    w_mat = jnp.pad(w_mat, ((0, k_pad - k), (0, oc_pad - oc)))
    b_row = jnp.pad(b_q, (0, oc_pad - oc)).reshape(1, oc_pad)

    vmem_limit = int(min(64 << 20, max(32 << 20, footprint(tk, tn) + (4 << 20))))

    kernel = functools.partial(
        _conv_q_kernel, scale=scale,
        int_path=(lvl_dtype == jnp.int8),
        f32_path=(lvl_dtype == jnp.float32))

    out_mat = pl.pallas_call(
        kernel,
        out_shape=jax.ShapeDtypeStruct((m_pad, oc_pad), jnp.float32),
        grid_spec=pltpu.PrefetchScalarGridSpec(
            num_scalar_prefetch=0,
            grid=(m_pad // tm, oc_pad // tn, k_pad // tk),
            in_specs=[
                pl.BlockSpec((tm, tk), lambda i, j, kk: (i, kk)),
                pl.BlockSpec((tk, tn), lambda i, j, kk: (kk, j)),
                pl.BlockSpec((1, tn), lambda i, j, kk: (0, j)),
            ],
            out_specs=pl.BlockSpec((tm, tn), lambda i, j, kk: (i, j)),
        ),
        compiler_params=pltpu.CompilerParams(
            dimension_semantics=("parallel", "parallel", "arbitrary"),
            vmem_limit_bytes=vmem_limit),
    )(patches, w_mat, b_row)

    out_mat = out_mat[:m, :oc]                               # drop M / OC padding
    # TODO(synk): emit NHWC / (M, OC) directly when the consumer allows it; the
    # NCHW transpose below is an extra HBM read+write pass kept for fidelity.
    out = out_mat.reshape(n, oh, ow, oc).transpose(0, 3, 1, 2)
    return out


def conv2d_q_reference(x, weight, bias, *, bits=8, step=2.0 ** (-5),
                       stride=(1, 1), padding=(0, 0)):
    qmin = -(2.0 ** (bits - 1))
    qmax = 2.0 ** (bits - 1) - 1.0
    q = lambda t: jnp.clip(jnp.round(t / step), qmin, qmax) * step
    xq, wq, bq = q(x), q(weight), q(bias)
    out = jax.lax.conv_general_dilated(
        xq, wq, window_strides=stride,
        padding=[(padding[0], padding[0]), (padding[1], padding[1])],
        dimension_numbers=("NCHW", "OIHW", "NCHW"),
        precision=jax.lax.Precision.HIGHEST)
    return out + bq.reshape(1, -1, 1, 1)


if __name__ == "__main__":
    # Module config (Conv2d_q(bits=8, in_channels=4, out_channels=8,
    #                         kernel_size=3, stride=1, padding=1, bias=True))
    bits = 8
    in_channels, out_channels = 4, 8
    kernel_size = (3, 3)
    stride = (1, 1)
    padding = (1, 1)
    batch, spatial = 2, 16

    key = jax.random.PRNGKey(0)
    kx, kw = jax.random.split(key)

    x = jax.random.normal(kx, (batch, in_channels, spatial, spatial), jnp.float32)

    # reset_parameters(): kaiming_normal_(weight, mode='fan_out', nonlinearity='relu')
    fan_out = out_channels * kernel_size[0] * kernel_size[1]
    w_std = (2.0 / fan_out) ** 0.5
    weight = w_std * jax.random.normal(
        kw, (out_channels, in_channels, kernel_size[0], kernel_size[1]), jnp.float32)
    bias = jnp.zeros((out_channels,), jnp.float32)  # nn.init.zeros_(bias)

    out = conv2d_q_forward(x, weight, bias, bits=bits,
                           stride=stride, padding=padding)
    out = jax.block_until_ready(out)

    ref = conv2d_q_reference(x, weight, bias, bits=bits,
                             stride=stride, padding=padding)
    assert out.shape == (batch, out_channels, spatial, spatial), out.shape
    assert jnp.allclose(out, ref, rtol=1e-5, atol=1e-5), \
        float(jnp.max(jnp.abs(out - ref)))

    print("KERNEL_OK")
</pallas_src>

<mosaic_0001>
module attributes {stable_mosaic.version = 11 : i64} {
  func.func @_conv_q_kernel(%arg0: i32, %arg1: i32, %arg2: i32, %arg3: memref<256x128xbf16, #tpu.memory_space<vmem>>, %arg4: memref<128x128xbf16, #tpu.memory_space<vmem>>, %arg5: memref<1x128xf32, #tpu.memory_space<vmem>>, %arg6: memref<256x128xf32, #tpu.memory_space<vmem>>) attributes {dimension_semantics = [#tpu.dimension_semantics<parallel>, #tpu.dimension_semantics<parallel>, #tpu.dimension_semantics<arbitrary>], iteration_bounds = array<i64: 2, 1, 1>, scalar_prefetch = 0 : i64, scratch_operands = 0 : i64, tpu.core_type = #tpu.core_type<tc>, window_params = [{transform_indices = @transform_0, window_bounds = array<i64: 256, 128>}, {transform_indices = @transform_1, window_bounds = array<i64: 128, 128>}, {transform_indices = @transform_2, window_bounds = array<i64: 1, 128>}, {transform_indices = @transform_3, window_bounds = array<i64: 256, 128>}]} {
    %c0_i32 = arith.constant 0 : i32
    %0 = arith.cmpi eq, %arg2, %c0_i32 : i32
    %1 = arith.extui %0 : i1 to i32
    %c0_i32_0 = arith.constant 0 : i32
    %2 = arith.cmpi ne, %1, %c0_i32_0 : i32
    scf.if %2 {
      %cst_10 = arith.constant 0.000000e+00 : f32
      %12 = vector.broadcast %cst_10 : f32 to vector<256x128xf32>
      %c0_11 = arith.constant 0 : index
      %c0_12 = arith.constant 0 : index
      %13 = vector.load %arg6[%c0_11, %c0_12] : memref<256x128xf32, #tpu.memory_space<vmem>>, vector<256x128xf32>
      tpu.vector_store %arg6[%c0_11, %c0_12], %12 {strides = array<i32>} : memref<256x128xf32, #tpu.memory_space<vmem>>, vector<256x128xf32>,
    } else {
    }
    %c0 = arith.constant 0 : index
    %c0_1 = arith.constant 0 : index
    %3 = vector.load %arg3[%c0, %c0_1] : memref<256x128xbf16, #tpu.memory_space<vmem>>, vector<256x128xbf16>
    %c0_2 = arith.constant 0 : index
    %c0_3 = arith.constant 0 : index
    %4 = vector.load %arg4[%c0_2, %c0_3] : memref<128x128xbf16, #tpu.memory_space<vmem>>, vector<128x128xbf16>
    %cst = arith.constant dense<0.000000e+00> : vector<256x128xf32>
    %5 = tpu.matmul %3, %4, %cst {dimension_numbers = #tpu.dot_dimension_numbers<[1], [0], [0], [1], [0, 0, 1, 1], [], []>} : vector<256x128xbf16>, vector<128x128xbf16>, vector<256x128xf32> -> vector<256x128xf32>
    %c0_4 = arith.constant 0 : index
    %c0_5 = arith.constant 0 : index
    %6 = vector.load %arg6[%c0_4, %c0_5] : memref<256x128xf32, #tpu.memory_space<vmem>>, vector<256x128xf32>
    %7 = arith.addf %6, %5 : vector<256x128xf32>
    %c0_6 = arith.constant 0 : index
    %c0_7 = arith.constant 0 : index
    %8 = vector.load %arg6[%c0_6, %c0_7] : memref<256x128xf32, #tpu.memory_space<vmem>>, vector<256x128xf32>
    tpu.vector_store %arg6[%c0_6, %c0_7], %7 {strides = array<i32>} : memref<256x128xf32, #tpu.memory_space<vmem>>, vector<256x128xf32>,
    %c0_i32_8 = arith.constant 0 : i32
    %9 = arith.cmpi eq, %arg2, %c0_i32_8 : i32
    %10 = arith.extui %9 : i1 to i32
    %c0_i32_9 = arith.constant 0 : i32
    %11 = arith.cmpi ne, %10, %c0_i32_9 : i32
    scf.if %11 {
      %c0_10 = arith.constant 0 : index
      %c0_11 = arith.constant 0 : index
      %12 = vector.load %arg6[%c0_10, %c0_11] : memref<256x128xf32, #tpu.memory_space<vmem>>, vector<256x128xf32>
      %cst_12 = arith.constant 9.765625E-4 : f32
      %13 = vector.broadcast %cst_12 : f32 to vector<256x128xf32>
      %14 = arith.mulf %12, %13 : vector<256x128xf32>
      %c0_13 = arith.constant 0 : index
      %c0_14 = arith.constant 0 : index
      %15 = vector.load %arg5[%c0_13, %c0_14] : memref<1x128xf32, #tpu.memory_space<vmem>>, vector<1x128xf32>
      %16 = vector.broadcast %15 : vector<1x128xf32> to vector<256x128xf32>
      %17 = arith.addf %14, %16 : vector<256x128xf32>
      %c0_15 = arith.constant 0 : index
      %c0_16 = arith.constant 0 : index
      %18 = vector.load %arg6[%c0_15, %c0_16] : memref<256x128xf32, #tpu.memory_space<vmem>>, vector<256x128xf32>
      tpu.vector_store %arg6[%c0_15, %c0_16], %17 {strides = array<i32>} : memref<256x128xf32, #tpu.memory_space<vmem>>, vector<256x128xf32>,
    } else {
    }
    return
  }
  func.func @transform_0(%arg0: i32, %arg1: i32, %arg2: i32) -> (i32, i32) {
    %c0_i32 = arith.constant 0 : i32
    return %arg0, %arg2 : i32, i32
  }
  func.func @transform_1(%arg0: i32, %arg1: i32, %arg2: i32) -> (i32, i32) {
    %c0_i32 = arith.constant 0 : i32
    return %arg2, %arg1 : i32, i32
  }
  func.func @transform_2(%arg0: i32, %arg1: i32, %arg2: i32) -> (i32, i32) {
    %c0_i32 = arith.constant 0 : i32
    %c0_i32_0 = arith.constant 0 : i32
    return %c0_i32, %arg1 : i32, i32
  }
  func.func @transform_3(%arg0: i32, %arg1: i32, %arg2: i32) -> (i32, i32) {
    %c0_i32 = arith.constant 0 : i32
    return %arg0, %arg1 : i32, i32
  }
}

</mosaic_0001>

<llo_original>
// kernel: conv2d_q_forward.1
$region0: #{conv2d_q_forward.1}
  #allocation0 [shape = 'u32[]', space=smem, size = 0x4, offset = 0x4, fixed_abs, tag = 'smem constant byte address 0x4 - core index']
  #allocation1 [shape = 'u32[72,128]{1,0:T(1,128)}', space=vmem, size = 0x9000, scoped, tag = 'internal scratch']
  %s0 = inlined_call_operand.vmem [shape: bf16[512,128], index: 0, kind: input, shape index: {}]
  %s1 = inlined_call_operand.vmem [shape: bf16[128,128], index: 1, kind: input, shape index: {}]
  %s2 = inlined_call_operand.vmem [shape: f32[1,128], index: 2, kind: input, shape index: {}]
  %s3 = inlined_call_operand.vmem [shape: f32[512,128], index: 3, kind: output, shape index: {}]
  %s4 = sld [smem:[#allocation0]]
  $region53: #{conv2d_q_forward.1} parent=0
    _
  %s6 = ssub.s32 1, %s4
  %s7 = scalar_select 0, %s6, %s4
  loop: start=0, step=1, limit=4
  $region2: #{conv2d_q_forward.1} parent=0 // loop_pre_header
    _
  $region3: #{conv2d_q_forward.1} parent=0 // loop_header
    %s9 = sphi 0, %s13
    %p10 = scmp.ge.s32.totalorder %s9, 4
    %s16 = sphi 0, %s35
    %s17 = sphi 0, %s31
    %s18 = sphi 0, %s27
    %s19 = sphi 0, %s16
    %s20 = sphi 0, %s17
    %s21 = sphi 0, %s18
    %s22 = sphi 0, %s19
    %s23 = sphi 0, %s20
    %s24 = sphi 0, %s21
    %s40 = sphi 0, %s42
    %s43 = sphi 0, %s40
    %s44 = sphi 0, %s43
    %s60 = sphi 0, %s44
    %s68 = sphi 0, %s70
    %s71 = sphi 0, %s68
    %s72 = sphi 0, %s71
    %s88 = sphi 0, %s72
    %s94 = sphi 0, %s96
    %s97 = sphi 0, %s94
    %s98 = sphi 0, %s97
    %s114 = sphi 0, %s98
    %s122 = sphi 0, %s124
    %s125 = sphi 0, %s122
    %s126 = sphi 0, %s125
    %s142 = sphi 0, %s126
  $region4: #{conv2d_q_forward.1} parent=0 // loop_header_branch
    %12 = sbr.rel (%p10) target = $region8
  $region5: #{conv2d_q_forward.1} parent=0 // loop_body
    %s14 = ssub.s32 %s9, 1
    %s15 = ssub.s32 %s9, 2
    %s25 = sadd.s32 1, %s18
    %p26 = scmp.ge.s32.totalorder %s25, 1
    %s27 = scalar_select %p26, 0, %s25
    %s28 = sadd.s32 1, %s17
    %s29 = scalar_select %p26, %s28, %s17
    %p30 = scmp.ge.s32.totalorder %s29, 1
    %s31 = scalar_select %p30, 0, %s29
    %s32 = sadd.s32 1, %s16
    %s33 = scalar_select %p30, %s32, %s16
    %p34 = scmp.ge.s32.totalorder %s33, 2
    %s35 = scalar_select %p34, 0, %s33
    %s36 = ssub.s32 %s16, %s35
    %s37 = ssub.s32 %s18, %s27
    %s38 = sor.u32 %s36, %s37
    %p39 = scmp.eq.s32.totalorder %s38, 0
    %s41 = sadd.s32 %s40, 1
    %s42 = scalar_select %p39, %s40, %s41
    %p45 = pneg %p39
    %p46 = scmp.eq.s32.totalorder %s9, 1
    %p47 = por %p45, %p46
    %p48 = scmp.ne.s32.totalorder %s40, %s43
    %p49 = scmp.eq.s32.totalorder %s9, 0
    %p50 = por %p48, %p49
    %p51 = scmp.ne.s32.totalorder %s40, %s43
    %p52 = scmp.eq.s32.totalorder %s14, 1
    %p53 = por %p51, %p52
    %p54 = scmp.ne.s32.totalorder %s43, %s44
    %p55 = scmp.eq.s32.totalorder %s14, 0
    %p56 = por %p54, %p55
    %p57 = scmp.ne.s32.totalorder %s43, %s44
    %p58 = scmp.eq.s32.totalorder %s15, 1
    %p59 = por %p57, %p58
    %p61 = scmp.ne.s32.totalorder %s44, %s60
    %p62 = scmp.eq.s32.totalorder %s15, 0
    %p63 = por %p61, %p62
    %s64 = ssub.s32 %s18, %s27
    %s65 = ssub.s32 %s17, %s31
    %s66 = sor.u32 %s64, %s65
    %p67 = scmp.eq.s32.totalorder %s66, 0
    %s69 = sadd.s32 %s68, 1
    %s70 = scalar_select %p67, %s68, %s69
    %p73 = pneg %p67
    %p74 = scmp.eq.s32.totalorder %s9, 1
    %p75 = por %p73, %p74
    %p76 = scmp.ne.s32.totalorder %s68, %s71
    %p77 = scmp.eq.s32.totalorder %s9, 0
    %p78 = por %p76, %p77
    %p79 = scmp.ne.s32.totalorder %s68, %s71
    %p80 = scmp.eq.s32.totalorder %s14, 1
    %p81 = por %p79, %p80
    %p82 = scmp.ne.s32.totalorder %s71, %s72
    %p83 = scmp.eq.s32.totalorder %s14, 0
    %p84 = por %p82, %p83
    %p85 = scmp.ne.s32.totalorder %s71, %s72
    %p86 = scmp.eq.s32.totalorder %s15, 1
    %p87 = por %p85, %p86
    %p89 = scmp.ne.s32.totalorder %s72, %s88
    %p90 = scmp.eq.s32.totalorder %s15, 0
    %p91 = por %p89, %p90
    %s92 = ssub.s32 %s17, %s31
    %p93 = scmp.eq.s32.totalorder %s92, 0
    %s95 = sadd.s32 %s94, 1
    %s96 = scalar_select %p93, %s94, %s95
    %p99 = pneg %p93
    %p100 = scmp.eq.s32.totalorder %s9, 1
    %p101 = por %p99, %p100
    %p102 = scmp.ne.s32.totalorder %s94, %s97
    %p103 = scmp.eq.s32.totalorder %s9, 0
    %p104 = por %p102, %p103
    %p105 = scmp.ne.s32.totalorder %s94, %s97
    %p106 = scmp.eq.s32.totalorder %s14, 1
    %p107 = por %p105, %p106
    %p108 = scmp.ne.s32.totalorder %s97, %s98
    %p109 = scmp.eq.s32.totalorder %s14, 0
    %p110 = por %p108, %p109
    %p111 = scmp.ne.s32.totalorder %s97, %s98
    %p112 = scmp.eq.s32.totalorder %s15, 1
    %p113 = por %p111, %p112
    %p115 = scmp.ne.s32.totalorder %s98, %s114
    %p116 = scmp.eq.s32.totalorder %s15, 0
    %p117 = por %p115, %p116
    %s118 = ssub.s32 %s16, %s35
    %s119 = ssub.s32 %s17, %s31
    %s120 = sor.u32 %s118, %s119
    %p121 = scmp.eq.s32.totalorder %s120, 0
    %s123 = sadd.s32 %s122, 1
    %s124 = scalar_select %p121, %s122, %s123
    %p127 = pneg %p121
    %p128 = scmp.eq.s32.totalorder %s9, 1
    %p129 = por %p127, %p128
    %p130 = scmp.ne.s32.totalorder %s122, %s125
    %p131 = scmp.eq.s32.totalorder %s9, 0
    %p132 = por %p130, %p131
    %p133 = scmp.ne.s32.totalorder %s122, %s125
    %p134 = scmp.eq.s32.totalorder %s14, 1
    %p135 = por %p133, %p134
    %p136 = scmp.ne.s32.totalorder %s125, %s126
    %p137 = scmp.eq.s32.totalorder %s14, 0
    %p138 = por %p136, %p137
    %p139 = scmp.ne.s32.totalorder %s125, %s126
    %p140 = scmp.eq.s32.totalorder %s15, 1
    %p141 = por %p139, %p140
    %p143 = scmp.ne.s32.totalorder %s126, %s142
    %p144 = scmp.eq.s32.totalorder %s15, 0
    %p145 = por %p143, %p144
    %p146 = scmp.le.s32.totalorder 1, %s9
    %p147 = scmp.lt.s32.totalorder %s9, 3
    %p148 = pnand %p146, %p147
    %p149 = pneg %p148
    // Predicated region
    $region9: #{conv2d_q_forward.1} parent=5 // pred_check
      _
    $region10: #{conv2d_q_forward.1} parent=5 // pred_check_branch
      %151 = sbr.rel (%p148) target = $region12
    $region11: #{conv2d_q_forward.1} parent=5 // pred_region
      %s152 = ssub.s32 %s9, 1
      // Predicated region
      $region13: #{conv2d_q_forward.1} parent=11 // pred_check
        %p153 = pneg %p84
      $region14: #{conv2d_q_forward.1} parent=11 // pred_check_branch
        %155 = sbr.rel (%p153) target = $region16
      $region15: #{conv2d_q_forward.1} parent=11 // pred_region
        %s156 = smul.u32 16, %s21
        %p157 = scmp.lt.s32.totalorder %s156, 15
        %s158 = scalar_select %p157, %s156, 15
        %p159 = scmp.lt.s32.totalorder %s20, 0
        %s160 = scalar_select %p159, %s20, 0
        %s161 = sadd.s32 %s160, %s158
        %s162 = smul.addr %s161, 4
        %s163 = scalar_lea.vmem %s1, %s162
        %s164 = smul.u32 16, %s21
      $region16: #{conv2d_q_forward.1} parent=11 // pred_fallthru
        _
      // Predicated region
      $region17: #{conv2d_q_forward.1} parent=11 // pred_check
        %p165 = pneg %p110
      $region18: #{conv2d_q_forward.1} parent=11 // pred_check_branch
        %167 = sbr.rel (%p165) target = $region20
      $region19: #{conv2d_q_forward.1} parent=11 // pred_region
        %p168 = scmp.lt.s32.totalorder %s20, 0
        %s169 = scalar_select %p168, %s20, 0
        %s170 = scalar_lea.vmem %s2, %s169
      $region20: #{conv2d_q_forward.1} parent=11 // pred_fallthru
        _
    $region12: #{conv2d_q_forward.1} parent=5 // pred_fallthru
      _
    %p171 = scmp.lt.s32.totalorder %s9, 2
    // Predicated region
    $region21: #{conv2d_q_forward.1} parent=5 // pred_check
      %p172 = pneg %p171
    $region22: #{conv2d_q_forward.1} parent=5 // pred_check_branch
      %174 = sbr.rel (%p172) target = $region24
    $region23: #{conv2d_q_forward.1} parent=5 // pred_region
      // Predicated region
      $region25: #{conv2d_q_forward.1} parent=23 // pred_check
        %p175 = pneg %p50
      $region26: #{conv2d_q_forward.1} parent=23 // pred_check_branch
        %177 = sbr.rel (%p175) target = $region28
      $region27: #{conv2d_q_forward.1} parent=23 // pred_region
        %s178 = smul.u32 32, %s16
        %p179 = scmp.lt.s32.totalorder %s178, 63
        %s180 = scalar_select %p179, %s178, 63
        %p181 = scmp.lt.s32.totalorder %s18, 0
        %s182 = scalar_select %p181, %s18, 0
        %s183 = sadd.s32 %s182, %s180
        %s184 = smul.addr %s183, 4
        %s185 = scalar_lea.vmem %s0, %s184
        %s186 = smul.u32 32, %s16
      $region28: #{conv2d_q_forward.1} parent=23 // pred_fallthru
        _
    $region24: #{conv2d_q_forward.1} parent=5 // pred_fallthru
      _
    %p187 = scmp.le.s32.totalorder 1, %s9
    %p188 = scmp.lt.s32.totalorder %s9, 3
    %p189 = pnand %p187, %p188
    %p190 = pneg %p189
    // Predicated region
    $region29: #{conv2d_q_forward.1} parent=5 // pred_check
      _
    $region30: #{conv2d_q_forward.1} parent=5 // pred_check_branch
      %192 = sbr.rel (%p189) target = $region32
    $region31: #{conv2d_q_forward.1} parent=5 // pred_region
      %s193 = ssub.s32 %s9, 1
      %s194 = smul.u32 32, %s19
      %p195 = scmp.lt.s32.totalorder %s194, 63
      %s196 = scalar_select %p195, %s194, 63
      %p197 = scmp.lt.s32.totalorder %s21, 0
      %s198 = scalar_select %p197, %s21, 0
      %s199 = sadd.s32 %s198, %s196
      %s200 = smul.addr %s199, 4
      %s201 = scalar_lea.vmem %s0, %s200
      %p202 = pneg %p56
      %p203 = pneg %p53
      %s204 = smul.u32 16, %s21
      %p205 = scmp.lt.s32.totalorder %s204, 15
      %s206 = scalar_select %p205, %s204, 15
      %p207 = scmp.lt.s32.totalorder %s20, 0
      %s208 = scalar_select %p207, %s20, 0
      %s209 = sadd.s32 %s208, %s206
      %s210 = smul.addr %s209, 4
      %s211 = scalar_lea.vmem %s1, %s210
      %p212 = pneg %p84
      %p213 = pneg %p81
      %p214 = scmp.lt.s32.totalorder %s20, 0
      %s215 = scalar_select %p214, %s20, 0
      %s216 = scalar_lea.vmem %s2, %s215
      %p217 = pneg %p110
      %p218 = pneg %p107
      %p219 = pneg %p138
      %p220 = pneg %p135
      %s221 = smul.u32 32, %s19
      %p222 = scmp.lt.s32.totalorder %s221, 63
      %s223 = scalar_select %p222, %s221, 63
      %p224 = scmp.lt.s32.totalorder %s20, 0
      %s225 = scalar_select %p224, %s20, 0
      %s226 = sadd.s32 %s225, %s223
      %s227 = smul.addr %s226, 8
      %s228 = scalar_lea.vmem %s3, %s227
      %s229 = smul.u32 32, %s19
      %p230 = scmp.lt.s32.totalorder %s229, 63
      %s231 = scalar_select %p230, %s229, 63
      %p232 = scmp.lt.s32.totalorder %s21, 0
      %s233 = scalar_select %p232, %s21, 0
      %s234 = sadd.s32 %s233, %s231
      %s235 = smul.addr %s234, 4
      %s236 = scalar_lea.vmem %s0, %s235
      %s237 = smul.u32 32, %s19
      %s238 = smul.u32 16, %s21
      %p239 = scmp.lt.s32.totalorder %s238, 15
      %s240 = scalar_select %p239, %s238, 15
      %p241 = scmp.lt.s32.totalorder %s20, 0
      %s242 = scalar_select %p241, %s20, 0
      %s243 = sadd.s32 %s242, %s240
      %s244 = smul.addr %s243, 4
      %s245 = scalar_lea.vmem %s1, %s244
      %s246 = smul.u32 16, %s21
      %p247 = scmp.lt.s32.totalorder %s20, 0
      %s248 = scalar_select %p247, %s20, 0
      %s249 = scalar_lea.vmem %s2, %s248
      %s250 = smul.u32 32, %s19
      %p251 = scmp.lt.s32.totalorder %s250, 63
      %s252 = scalar_select %p251, %s250, 63
      %p253 = scmp.lt.s32.totalorder %s20, 0
      %s254 = scalar_select %p253, %s20, 0
      %s255 = sadd.s32 %s254, %s252
      %s256 = smul.addr %s255, 8
      %s257 = scalar_lea.vmem %s3, %s256
      %s258 = smul.u32 32, %s19
      %p259 = scmp.eq.s32.totalorder %s21, 0
      // Predicated region
      $region33: #{conv2d_q_forward.1} parent=31 // pred_check
        %p260 = pneg %p259
      $region34: #{conv2d_q_forward.1} parent=31 // pred_check_branch
        %262 = sbr.rel (%p260) target = $region36
      $region35: #{conv2d_q_forward.1} parent=31 // pred_region
        %263 = vst [vmem:[%s257] sm:$0xff] 0.0
        %264 = vst [vmem:[%s257 + $0x8] sm:$0xff] 0.0
        %265 = vst [vmem:[%s257 + $0x10] sm:$0xff] 0.0
        %266 = vst [vmem:[%s257 + $0x18] sm:$0xff] 0.0
        %267 = vst [vmem:[%s257 + $0x20] sm:$0xff] 0.0
        %268 = vst [vmem:[%s257 + $0x28] sm:$0xff] 0.0
        %269 = vst [vmem:[%s257 + $0x30] sm:$0xff] 0.0
        %270 = vst [vmem:[%s257 + $0x38] sm:$0xff] 0.0
        %271 = vst [vmem:[%s257 + $0x40] sm:$0xff] 0.0
        %272 = vst [vmem:[%s257 + $0x48] sm:$0xff] 0.0
        %273 = vst [vmem:[%s257 + $0x50] sm:$0xff] 0.0
        %274 = vst [vmem:[%s257 + $0x58] sm:$0xff] 0.0
        %275 = vst [vmem:[%s257 + $0x60] sm:$0xff] 0.0
        %276 = vst [vmem:[%s257 + $0x68] sm:$0xff] 0.0
        %277 = vst [vmem:[%s257 + $0x70] sm:$0xff] 0.0
        %278 = vst [vmem:[%s257 + $0x78] sm:$0xff] 0.0
        %279 = vst [vmem:[%s257 + $0x80] sm:$0xff] 0.0
        %280 = vst [vmem:[%s257 + $0x88] sm:$0xff] 0.0
        %281 = vst [vmem:[%s257 + $0x90] sm:$0xff] 0.0
        %282 = vst [vmem:[%s257 + $0x98] sm:$0xff] 0.0
        %283 = vst [vmem:[%s257 + $0xa0] sm:$0xff] 0.0
        %284 = vst [vmem:[%s257 + $0xa8] sm:$0xff] 0.0
        %285 = vst [vmem:[%s257 + $0xb0] sm:$0xff] 0.0
        %286 = vst [vmem:[%s257 + $0xb8] sm:$0xff] 0.0
        %287 = vst [vmem:[%s257 + $0xc0] sm:$0xff] 0.0
        %288 = vst [vmem:[%s257 + $0xc8] sm:$0xff] 0.0
        %289 = vst [vmem:[%s257 + $0xd0] sm:$0xff] 0.0
        %290 = vst [vmem:[%s257 + $0xd8] sm:$0xff] 0.0
        %291 = vst [vmem:[%s257 + $0xe0] sm:$0xff] 0.0
        %292 = vst [vmem:[%s257 + $0xe8] sm:$0xff] 0.0
        %293 = vst [vmem:[%s257 + $0xf0] sm:$0xff] 0.0
        %294 = vst [vmem:[%s257 + $0xf8] sm:$0xff] 0.0
      $region36: #{conv2d_q_forward.1} parent=31 // pred_fallthru
        _
      %v295 = vld [vmem:[%s236] sm:$0xf]
      %v296 = vld [vmem:[%s236 + $0x4] sm:$0xf]
      %v297 = vld [vmem:[%s236 + $0x8] sm:$0xf]
      %v298 = vld [vmem:[%s236 + $0xc] sm:$0xf]
      %v299 = vld [vmem:[%s236 + $0x10] sm:$0xf]
      %v300 = vld [vmem:[%s236 + $0x14] sm:$0xf]
      %v301 = vld [vmem:[%s236 + $0x18] sm:$0xf]
      %v302 = vld [vmem:[%s236 + $0x1c] sm:$0xf]
      %v303 = vld [vmem:[%s236 + $0x20] sm:$0xf]
      %v304 = vld [vmem:[%s236 + $0x24] sm:$0xf]
      %v305 = vld [vmem:[%s236 + $0x28] sm:$0xf]
      %v306 = vld [vmem:[%s236 + $0x2c] sm:$0xf]
      %v307 = vld [vmem:[%s236 + $0x30] sm:$0xf]
      %v308 = vld [vmem:[%s236 + $0x34] sm:$0xf]
      %v309 = vld [vmem:[%s236 + $0x38] sm:$0xf]
      %v310 = vld [vmem:[%s236 + $0x3c] sm:$0xf]
      %v311 = vld [vmem:[%s236 + $0x40] sm:$0xf]
      %v312 = vld [vmem:[%s236 + $0x44] sm:$0xf]
      %v313 = vld [vmem:[%s236 + $0x48] sm:$0xf]
      %v314 = vld [vmem:[%s236 + $0x4c] sm:$0xf]
      %v315 = vld [vmem:[%s236 + $0x50] sm:$0xf]
      %v316 = vld [vmem:[%s236 + $0x54] sm:$0xf]
      %v317 = vld [vmem:[%s236 + $0x58] sm:$0xf]
      %v318 = vld [vmem:[%s236 + $0x5c] sm:$0xf]
      %v319 = vld [vmem:[%s236 + $0x60] sm:$0xf]
      %v320 = vld [vmem:[%s236 + $0x64] sm:$0xf]
      %v321 = vld [vmem:[%s236 + $0x68] sm:$0xf]
      %v322 = vld [vmem:[%s236 + $0x6c] sm:$0xf]
      %v323 = vld [vmem:[%s236 + $0x70] sm:$0xf]
      %v324 = vld [vmem:[%s236 + $0x74] sm:$0xf]
      %v325 = vld [vmem:[%s236 + $0x78] sm:$0xf]
      %v326 = vld [vmem:[%s236 + $0x7c] sm:$0xf]
      %v327 = vld [vmem:[%s245] sm:$0xf]
      %v328 = vld [vmem:[%s245 + $0x4] sm:$0xf]
      %v329 = vld [vmem:[%s245 + $0x8] sm:$0xf]
      %v330 = vld [vmem:[%s245 + $0xc] sm:$0xf]
      %v331 = vld [vmem:[%s245 + $0x10] sm:$0xf]
      %v332 = vld [vmem:[%s245 + $0x14] sm:$0xf]
      %v333 = vld [vmem:[%s245 + $0x18] sm:$0xf]
      %v334 = vld [vmem:[%s245 + $0x1c] sm:$0xf]
      %v335 = vld [vmem:[%s245 + $0x20] sm:$0xf]
      %v336 = vld [vmem:[%s245 + $0x24] sm:$0xf]
      %v337 = vld [vmem:[%s245 + $0x28] sm:$0xf]
      %v338 = vld [vmem:[%s245 + $0x2c] sm:$0xf]
      %v339 = vld [vmem:[%s245 + $0x30] sm:$0xf]
      %v340 = vld [vmem:[%s245 + $0x34] sm:$0xf]
      %v341 = vld [vmem:[%s245 + $0x38] sm:$0xf]
      %v342 = vld [vmem:[%s245 + $0x3c] sm:$0xf]
      %v375 = vunpack.c.l.b16 %v295
      %v376 = vunpack.c.l.b16 %v296
      %v377 = vunpack.c.l.b16 %v297
      %v378 = vunpack.c.l.b16 %v298
      %v379 = vunpack.c.l.b16 %v299
      %v380 = vunpack.c.l.b16 %v300
      %v381 = vunpack.c.l.b16 %v301
      %v382 = vunpack.c.l.b16 %v302
      %v383 = vunpack.c.l.b16 %v303
      %v384 = vunpack.c.l.b16 %v304
      %v385 = vunpack.c.l.b16 %v305
      %v386 = vunpack.c.l.b16 %v306
      %v387 = vunpack.c.l.b16 %v307
      %v388 = vunpack.c.l.b16 %v308
      %v389 = vunpack.c.l.b16 %v309
      %v390 = vunpack.c.l.b16 %v310
      %v391 = vunpack.c.l.b16 %v311
      %v392 = vunpack.c.l.b16 %v312
      %v393 = vunpack.c.l.b16 %v313
      %v394 = vunpack.c.l.b16 %v314
      %v395 = vunpack.c.l.b16 %v315
      %v396 = vunpack.c.l.b16 %v316
      %v397 = vunpack.c.l.b16 %v317
      %v398 = vunpack.c.l.b16 %v318
      %v399 = vunpack.c.l.b16 %v319
      %v400 = vunpack.c.l.b16 %v320
      %v401 = vunpack.c.l.b16 %v321
      %v402 = vunpack.c.l.b16 %v322
      %v403 = vunpack.c.l.b16 %v323
      %v404 = vunpack.c.l.b16 %v324
      %v405 = vunpack.c.l.b16 %v325
      %v406 = vunpack.c.l.b16 %v326
      %v407 = vpack.c.b16 %v376, %v375
      %v408 = vpack.c.b16 %v378, %v377
      %v409 = vpack.c.b16 %v380, %v379
      %v410 = vpack.c.b16 %v382, %v381
      %v411 = vpack.c.b16 %v384, %v383
      %v412 = vpack.c.b16 %v386, %v385
      %v413 = vpack.c.b16 %v388, %v387
      %v414 = vpack.c.b16 %v390, %v389
      %v415 = vpack.c.b16 %v392, %v391
      %v416 = vpack.c.b16 %v394, %v393
      %v417 = vpack.c.b16 %v396, %v395
      %v418 = vpack.c.b16 %v398, %v397
      %v419 = vpack.c.b16 %v400, %v399
      %v420 = vpack.c.b16 %v402, %v401
      %v421 = vpack.c.b16 %v404, %v403
      %v422 = vpack.c.b16 %v406, %v405
      %v455 = vunpack.c.l.b16 %v327
      %v456 = vunpack.c.l.b16 %v328
      %v457 = vunpack.c.l.b16 %v329
      %v458 = vunpack.c.l.b16 %v330
      %v459 = vunpack.c.l.b16 %v331
      %v460 = vunpack.c.l.b16 %v332
      %v461 = vunpack.c.l.b16 %v333
      %v462 = vunpack.c.l.b16 %v334
      %v463 = vunpack.c.l.b16 %v335
      %v464 = vunpack.c.l.b16 %v336
      %v465 = vunpack.c.l.b16 %v337
      %v466 = vunpack.c.l.b16 %v338
      %v467 = vunpack.c.l.b16 %v339
      %v468 = vunpack.c.l.b16 %v340
      %v469 = vunpack.c.l.b16 %v341
      %v470 = vunpack.c.l.b16 %v342
      %v471 = vpack.c.b16 %v456, %v455
      %v472 = vpack.c.b16 %v458, %v457
      %v473 = vpack.c.b16 %v460, %v459
      %v474 = vpack.c.b16 %v462, %v461
      %v475 = vpack.c.b16 %v464, %v463
      %v476 = vpack.c.b16 %v466, %v465
      %v477 = vpack.c.b16 %v468, %v467
      %v478 = vpack.c.b16 %v470, %v469
      %487 = vmatpush.bf16.msra.mxu0 %v478
      %488 = vmatpush.bf16.msra.mxu0 %v477
      %489 = vmatpush.bf16.msra.mxu0 %v476
      %490 = vmatpush.bf16.msra.mxu0 %v475
      %491 = vmatpush.bf16.msra.mxu0 %v474
      %492 = vmatpush.bf16.msra.mxu0 %v473
      %493 = vmatpush.bf16.msra.mxu0 %v472
      %494 = vmatpush.bf16.msra.mxu0 %v471
      %495 = vmatmul.bf16.gmra.mxu0 %v407
      %v496 = vpop.f32.mrf.mxu0
      %v497 = vadd.f32 0.0, %v496
      %v498 = vpop.f32.mrf.mxu0
      %v499 = vadd.f32 0.0, %v498
      %500 = vmatmul.bf16.gmra.mxu0 %v408
      %v501 = vpop.f32.mrf.mxu0
      %v502 = vadd.f32 0.0, %v501
      %v503 = vpop.f32.mrf.mxu0
      %v504 = vadd.f32 0.0, %v503
      %505 = vmatmul.bf16.gmra.mxu0 %v409
      %v506 = vpop.f32.mrf.mxu0
      %v507 = vadd.f32 0.0, %v506
      %v508 = vpop.f32.mrf.mxu0
      %v509 = vadd.f32 0.0, %v508
      %510 = vmatmul.bf16.gmra.mxu0 %v410
      %v511 = vpop.f32.mrf.mxu0
      %v512 = vadd.f32 0.0, %v511
      %v513 = vpop.f32.mrf.mxu0
      %v514 = vadd.f32 0.0, %v513
      %515 = vmatmul.bf16.gmra.mxu0 %v411
      %v516 = vpop.f32.mrf.mxu0
      %v517 = vadd.f32 0.0, %v516
      %v518 = vpop.f32.mrf.mxu0
      %v519 = vadd.f32 0.0, %v518
      %520 = vmatmul.bf16.gmra.mxu0 %v412
      %v521 = vpop.f32.mrf.mxu0
      %v522 = vadd.f32 0.0, %v521
      %v523 = vpop.f32.mrf.mxu0
      %v524 = vadd.f32 0.0, %v523
      %525 = vmatmul.bf16.gmra.mxu0 %v413
      %v526 = vpop.f32.mrf.mxu0
      %v527 = vadd.f32 0.0, %v526
      %v528 = vpop.f32.mrf.mxu0
      %v529 = vadd.f32 0.0, %v528
      %530 = vmatmul.bf16.gmra.mxu0 %v414
      %v531 = vpop.f32.mrf.mxu0
      %v532 = vadd.f32 0.0, %v531
      %v533 = vpop.f32.mrf.mxu0
      %v534 = vadd.f32 0.0, %v533
      %535 = vmatmul.bf16.gmra.mxu0 %v415
      %v536 = vpop.f32.mrf.mxu0
      %v537 = vadd.f32 0.0, %v536
      %v538 = vpop.f32.mrf.mxu0
      %v539 = vadd.f32 0.0, %v538
      %540 = vmatmul.bf16.gmra.mxu0 %v416
      %v541 = vpop.f32.mrf.mxu0
      %v542 = vadd.f32 0.0, %v541
      %v543 = vpop.f32.mrf.mxu0
      %v544 = vadd.f32 0.0, %v543
      %545 = vmatmul.bf16.gmra.mxu0 %v417
      %v546 = vpop.f32.mrf.mxu0
      %v547 = vadd.f32 0.0, %v546
      %v548 = vpop.f32.mrf.mxu0
      %v549 = vadd.f32 0.0, %v548
      %550 = vmatmul.bf16.gmra.mxu0 %v418
      %v551 = vpop.f32.mrf.mxu0
      %v552 = vadd.f32 0.0, %v551
      %v553 = vpop.f32.mrf.mxu0
      %v554 = vadd.f32 0.0, %v553
      %555 = vmatmul.bf16.gmra.mxu0 %v419
      %v556 = vpop.f32.mrf.mxu0
      %v557 = vadd.f32 0.0, %v556
      %v558 = vpop.f32.mrf.mxu0
      %v559 = vadd.f32 0.0, %v558
      %560 = vmatmul.bf16.gmra.mxu0 %v420
      %v561 = vpop.f32.mrf.mxu0
      %v562 = vadd.f32 0.0, %v561
      %v563 = vpop.f32.mrf.mxu0
      %v564 = vadd.f32 0.0, %v563
      %565 = vmatmul.bf16.gmra.mxu0 %v421
      %v566 = vpop.f32.mrf.mxu0
      %v567 = vadd.f32 0.0, %v566
      %v568 = vpop.f32.mrf.mxu0
      %v569 = vadd.f32 0.0, %v568
      %570 = vmatmul.bf16.gmra.mxu0 %v422
      %v571 = vpop.f32.mrf.mxu0
      %v572 = vadd.f32 0.0, %v571
      %v573 = vpop.f32.mrf.mxu0
      %v574 = vadd.f32 0.0, %v573
      %575 = vdwg.mxu0
      %v576 = vld [vmem:[%s257] sm:$0xff]
      %v577 = vld [vmem:[%s257 + $0x8] sm:$0xff]
      %v578 = vld [vmem:[%s257 + $0x10] sm:$0xff]
      %v579 = vld [vmem:[%s257 + $0x18] sm:$0xff]
      %v580 = vld [vmem:[%s257 + $0x20] sm:$0xff]
      %v581 = vld [vmem:[%s257 + $0x28] sm:$0xff]
      %v582 = vld [vmem:[%s257 + $0x30] sm:$0xff]
      %v583 = vld [vmem:[%s257 + $0x38] sm:$0xff]
      %v584 = vld [vmem:[%s257 + $0x40] sm:$0xff]
      %v585 = vld [vmem:[%s257 + $0x48] sm:$0xff]
      %v586 = vld [vmem:[%s257 + $0x50] sm:$0xff]
      %v587 = vld [vmem:[%s257 + $0x58] sm:$0xff]
      %v588 = vld [vmem:[%s257 + $0x60] sm:$0xff]
      %v589 = vld [vmem:[%s257 + $0x68] sm:$0xff]
      %v590 = vld [vmem:[%s257 + $0x70] sm:$0xff]
      %v591 = vld [vmem:[%s257 + $0x78] sm:$0xff]
      %v592 = vld [vmem:[%s257 + $0x80] sm:$0xff]
      %v593 = vld [vmem:[%s257 + $0x88] sm:$0xff]
      %v594 = vld [vmem:[%s257 + $0x90] sm:$0xff]
      %v595 = vld [vmem:[%s257 + $0x98] sm:$0xff]
      %v596 = vld [vmem:[%s257 + $0xa0] sm:$0xff]
      %v597 = vld [vmem:[%s257 + $0xa8] sm:$0xff]
      %v598 = vld [vmem:[%s257 + $0xb0] sm:$0xff]
      %v599 = vld [vmem:[%s257 + $0xb8] sm:$0xff]
      %v600 = vld [vmem:[%s257 + $0xc0] sm:$0xff]
      %v601 = vld [vmem:[%s257 + $0xc8] sm:$0xff]
      %v602 = vld [vmem:[%s257 + $0xd0] sm:$0xff]
      %v603 = vld [vmem:[%s257 + $0xd8] sm:$0xff]
      %v604 = vld [vmem:[%s257 + $0xe0] sm:$0xff]
      %v605 = vld [vmem:[%s257 + $0xe8] sm:$0xff]
      %v606 = vld [vmem:[%s257 + $0xf0] sm:$0xff]
      %v607 = vld [vmem:[%s257 + $0xf8] sm:$0xff]
      %v608 = vadd.f32 %v576, %v497
      %v609 = vadd.f32 %v577, %v499
      %v610 = vadd.f32 %v578, %v502
      %v611 = vadd.f32 %v579, %v504
      %v612 = vadd.f32 %v580, %v507
      %v613 = vadd.f32 %v581, %v509
      %v614 = vadd.f32 %v582, %v512
      %v615 = vadd.f32 %v583, %v514
      %v616 = vadd.f32 %v584, %v517
      %v617 = vadd.f32 %v585, %v519
      %v618 = vadd.f32 %v586, %v522
      %v619 = vadd.f32 %v587, %v524
      %v620 = vadd.f32 %v588, %v527
      %v621 = vadd.f32 %v589, %v529
      %v622 = vadd.f32 %v590, %v532
      %v623 = vadd.f32 %v591, %v534
      %v624 = vadd.f32 %v592, %v537
      %v625 = vadd.f32 %v593, %v539
      %v626 = vadd.f32 %v594, %v542
      %v627 = vadd.f32 %v595, %v544
      %v628 = vadd.f32 %v596, %v547
      %v629 = vadd.f32 %v597, %v549
      %v630 = vadd.f32 %v598, %v552
      %v631 = vadd.f32 %v599, %v554
      %v632 = vadd.f32 %v600, %v557
      %v633 = vadd.f32 %v601, %v559
      %v634 = vadd.f32 %v602, %v562
      %v635 = vadd.f32 %v603, %v564
      %v636 = vadd.f32 %v604, %v567
      %v637 = vadd.f32 %v605, %v569
      %v638 = vadd.f32 %v606, %v572
      %v639 = vadd.f32 %v607, %v574
      %640 = vst [vmem:[%s257] sm:$0xff] %v608
      %641 = vst [vmem:[%s257 + $0x8] sm:$0xff] %v609
      %642 = vst [vmem:[%s257 + $0x10] sm:$0xff] %v610
      %643 = vst [vmem:[%s257 + $0x18] sm:$0xff] %v611
      %644 = vst [vmem:[%s257 + $0x20] sm:$0xff] %v612
      %645 = vst [vmem:[%s257 + $0x28] sm:$0xff] %v613
      %646 = vst [vmem:[%s257 + $0x30] sm:$0xff] %v614
      %647 = vst [vmem:[%s257 + $0x38] sm:$0xff] %v615
      %648 = vst [vmem:[%s257 + $0x40] sm:$0xff] %v616
      %649 = vst [vmem:[%s257 + $0x48] sm:$0xff] %v617
      %650 = vst [vmem:[%s257 + $0x50] sm:$0xff] %v618
      %651 = vst [vmem:[%s257 + $0x58] sm:$0xff] %v619
      %652 = vst [vmem:[%s257 + $0x60] sm:$0xff] %v620
      %653 = vst [vmem:[%s257 + $0x68] sm:$0xff] %v621
      %654 = vst [vmem:[%s257 + $0x70] sm:$0xff] %v622
      %655 = vst [vmem:[%s257 + $0x78] sm:$0xff] %v623
      %656 = vst [vmem:[%s257 + $0x80] sm:$0xff] %v624
      %657 = vst [vmem:[%s257 + $0x88] sm:$0xff] %v625
      %658 = vst [vmem:[%s257 + $0x90] sm:$0xff] %v626
      %659 = vst [vmem:[%s257 + $0x98] sm:$0xff] %v627
      %660 = vst [vmem:[%s257 + $0xa0] sm:$0xff] %v628
      %661 = vst [vmem:[%s257 + $0xa8] sm:$0xff] %v629
      %662 = vst [vmem:[%s257 + $0xb0] sm:$0xff] %v630
      %663 = vst [vmem:[%s257 + $0xb8] sm:$0xff] %v631
      %664 = vst [vmem:[%s257 + $0xc0] sm:$0xff] %v632
      %665 = vst [vmem:[%s257 + $0xc8] sm:$0xff] %v633
      %666 = vst [vmem:[%s257 + $0xd0] sm:$0xff] %v634
      %667 = vst [vmem:[%s257 + $0xd8] sm:$0xff] %v635
      %668 = vst [vmem:[%s257 + $0xe0] sm:$0xff] %v636
      %669 = vst [vmem:[%s257 + $0xe8] sm:$0xff] %v637
      %670 = vst [vmem:[%s257 + $0xf0] sm:$0xff] %v638
      %671 = vst [vmem:[%s257 + $0xf8] sm:$0xff] %v639
      // Predicated region
      $region37: #{conv2d_q_forward.1} parent=31 // pred_check
        %p672 = pneg %p259
      $region38: #{conv2d_q_forward.1} parent=31 // pred_check_branch
        %674 = sbr.rel (%p672) target = $region40
      $region39: #{conv2d_q_forward.1} parent=31 // pred_region
        %v675 = vld [vmem:[%s257] sm:$0xff]
        %v676 = vld [vmem:[%s257 + $0x8] sm:$0xff]
        %v677 = vld [vmem:[%s257 + $0x10] sm:$0xff]
        %v678 = vld [vmem:[%s257 + $0x18] sm:$0xff]
        %v679 = vld [vmem:[%s257 + $0x20] sm:$0xff]
        %v680 = vld [vmem:[%s257 + $0x28] sm:$0xff]
        %v681 = vld [vmem:[%s257 + $0x30] sm:$0xff]
        %v682 = vld [vmem:[%s257 + $0x38] sm:$0xff]
        %v683 = vld [vmem:[%s257 + $0x40] sm:$0xff]
        %v684 = vld [vmem:[%s257 + $0x48] sm:$0xff]
        %v685 = vld [vmem:[%s257 + $0x50] sm:$0xff]
        %v686 = vld [vmem:[%s257 + $0x58] sm:$0xff]
        %v687 = vld [vmem:[%s257 + $0x60] sm:$0xff]
        %v688 = vld [vmem:[%s257 + $0x68] sm:$0xff]
        %v689 = vld [vmem:[%s257 + $0x70] sm:$0xff]
        %v690 = vld [vmem:[%s257 + $0x78] sm:$0xff]
        %v691 = vld [vmem:[%s257 + $0x80] sm:$0xff]
        %v692 = vld [vmem:[%s257 + $0x88] sm:$0xff]
        %v693 = vld [vmem:[%s257 + $0x90] sm:$0xff]
        %v694 = vld [vmem:[%s257 + $0x98] sm:$0xff]
        %v695 = vld [vmem:[%s257 + $0xa0] sm:$0xff]
        %v696 = vld [vmem:[%s257 + $0xa8] sm:$0xff]
        %v697 = vld [vmem:[%s257 + $0xb0] sm:$0xff]
        %v698 = vld [vmem:[%s257 + $0xb8] sm:$0xff]
        %v699 = vld [vmem:[%s257 + $0xc0] sm:$0xff]
        %v700 = vld [vmem:[%s257 + $0xc8] sm:$0xff]
        %v701 = vld [vmem:[%s257 + $0xd0] sm:$0xff]
        %v702 = vld [vmem:[%s257 + $0xd8] sm:$0xff]
        %v703 = vld [vmem:[%s257 + $0xe0] sm:$0xff]
        %v704 = vld [vmem:[%s257 + $0xe8] sm:$0xff]
        %v705 = vld [vmem:[%s257 + $0xf0] sm:$0xff]
        %v706 = vld [vmem:[%s257 + $0xf8] sm:$0xff]
        %v707 = vmul.f32 %v675, 0.0009765625
        %v708 = vmul.f32 %v676, 0.0009765625
        %v709 = vmul.f32 %v677, 0.0009765625
        %v710 = vmul.f32 %v678, 0.0009765625
        %v711 = vmul.f32 %v679, 0.0009765625
        %v712 = vmul.f32 %v680, 0.0009765625
        %v713 = vmul.f32 %v681, 0.0009765625
        %v714 = vmul.f32 %v682, 0.0009765625
        %v715 = vmul.f32 %v683, 0.0009765625
        %v716 = vmul.f32 %v684, 0.0009765625
        %v717 = vmul.f32 %v685, 0.0009765625
        %v718 = vmul.f32 %v686, 0.0009765625
        %v719 = vmul.f32 %v687, 0.0009765625
        %v720 = vmul.f32 %v688, 0.0009765625
        %v721 = vmul.f32 %v689, 0.0009765625
        %v722 = vmul.f32 %v690, 0.0009765625
        %v723 = vmul.f32 %v691, 0.0009765625
        %v724 = vmul.f32 %v692, 0.0009765625
        %v725 = vmul.f32 %v693, 0.0009765625
        %v726 = vmul.f32 %v694, 0.0009765625
        %v727 = vmul.f32 %v695, 0.0009765625
        %v728 = vmul.f32 %v696, 0.0009765625
        %v729 = vmul.f32 %v697, 0.0009765625
        %v730 = vmul.f32 %v698, 0.0009765625
        %v731 = vmul.f32 %v699, 0.0009765625
        %v732 = vmul.f32 %v700, 0.0009765625
        %v733 = vmul.f32 %v701, 0.0009765625
        %v734 = vmul.f32 %v702, 0.0009765625
        %v735 = vmul.f32 %v703, 0.0009765625
        %v736 = vmul.f32 %v704, 0.0009765625
        %v737 = vmul.f32 %v705, 0.0009765625
        %v738 = vmul.f32 %v706, 0.0009765625
        %v739 = vld [vmem:[%s249] sm:$0x1]
        %v741 = vperm.slane %v739, 0
        %v743 = vadd.f32 %v707, %v741
        %v744 = vadd.f32 %v708, %v741
        %v745 = vadd.f32 %v709, %v741
        %v746 = vadd.f32 %v710, %v741
        %v747 = vadd.f32 %v711, %v741
        %v748 = vadd.f32 %v712, %v741
        %v749 = vadd.f32 %v713, %v741
        %v750 = vadd.f32 %v714, %v741
        %v751 = vadd.f32 %v715, %v741
        %v752 = vadd.f32 %v716, %v741
        %v753 = vadd.f32 %v717, %v741
        %v754 = vadd.f32 %v718, %v741
        %v755 = vadd.f32 %v719, %v741
        %v756 = vadd.f32 %v720, %v741
        %v757 = vadd.f32 %v721, %v741
        %v758 = vadd.f32 %v722, %v741
        %v759 = vadd.f32 %v723, %v741
        %v760 = vadd.f32 %v724, %v741
        %v761 = vadd.f32 %v725, %v741
        %v762 = vadd.f32 %v726, %v741
        %v763 = vadd.f32 %v727, %v741
        %v764 = vadd.f32 %v728, %v741
        %v765 = vadd.f32 %v729, %v741
        %v766 = vadd.f32 %v730, %v741
        %v767 = vadd.f32 %v731, %v741
        %v768 = vadd.f32 %v732, %v741
        %v769 = vadd.f32 %v733, %v741
        %v770 = vadd.f32 %v734, %v741
        %v771 = vadd.f32 %v735, %v741
        %v772 = vadd.f32 %v736, %v741
        %v773 = vadd.f32 %v737, %v741
        %v774 = vadd.f32 %v738, %v741
        %775 = vst [vmem:[%s257] sm:$0xff] %v743
        %776 = vst [vmem:[%s257 + $0x8] sm:$0xff] %v744
        %777 = vst [vmem:[%s257 + $0x10] sm:$0xff] %v745
        %778 = vst [vmem:[%s257 + $0x18] sm:$0xff] %v746
        %779 = vst [vmem:[%s257 + $0x20] sm:$0xff] %v747
        %780 = vst [vmem:[%s257 + $0x28] sm:$0xff] %v748
        %781 = vst [vmem:[%s257 + $0x30] sm:$0xff] %v749
        %782 = vst [vmem:[%s257 + $0x38] sm:$0xff] %v750
        %783 = vst [vmem:[%s257 + $0x40] sm:$0xff] %v751
        %784 = vst [vmem:[%s257 + $0x48] sm:$0xff] %v752
        %785 = vst [vmem:[%s257 + $0x50] sm:$0xff] %v753
        %786 = vst [vmem:[%s257 + $0x58] sm:$0xff] %v754
        %787 = vst [vmem:[%s257 + $0x60] sm:$0xff] %v755
        %788 = vst [vmem:[%s257 + $0x68] sm:$0xff] %v756
        %789 = vst [vmem:[%s257 + $0x70] sm:$0xff] %v757
        %790 = vst [vmem:[%s257 + $0x78] sm:$0xff] %v758
        %791 = vst [vmem:[%s257 + $0x80] sm:$0xff] %v759
        %792 = vst [vmem:[%s257 + $0x88] sm:$0xff] %v760
        %793 = vst [vmem:[%s257 + $0x90] sm:$0xff] %v761
        %794 = vst [vmem:[%s257 + $0x98] sm:$0xff] %v762
        %795 = vst [vmem:[%s257 + $0xa0] sm:$0xff] %v763
        %796 = vst [vmem:[%s257 + $0xa8] sm:$0xff] %v764
        %797 = vst [vmem:[%s257 + $0xb0] sm:$0xff] %v765
        %798 = vst [vmem:[%s257 + $0xb8] sm:$0xff] %v766
        %799 = vst [vmem:[%s257 + $0xc0] sm:$0xff] %v767
        %800 = vst [vmem:[%s257 + $0xc8] sm:$0xff] %v768
        %801 = vst [vmem:[%s257 + $0xd0] sm:$0xff] %v769
        %802 = vst [vmem:[%s257 + $0xd8] sm:$0xff] %v770
        %803 = vst [vmem:[%s257 + $0xe0] sm:$0xff] %v771
        %804 = vst [vmem:[%s257 + $0xe8] sm:$0xff] %v772
        %805 = vst [vmem:[%s257 + $0xf0] sm:$0xff] %v773
        %806 = vst [vmem:[%s257 + $0xf8] sm:$0xff] %v774
      $region40: #{conv2d_q_forward.1} parent=31 // pred_fallthru
        _
      %s807 = smul.u32 32, %s19
      %p808 = scmp.lt.s32.totalorder %s807, 63
      %s809 = scalar_select %p808, %s807, 63
      %p810 = scmp.lt.s32.totalorder %s20, 0
      %s811 = scalar_select %p810, %s20, 0
      %s812 = sadd.s32 %s811, %s809
      %s813 = smul.addr %s812, 8
      %s814 = scalar_lea.vmem %s3, %s813
      // Predicated region
      $region41: #{conv2d_q_forward.1} parent=31 // pred_check
        %p815 = pneg %p135
      $region42: #{conv2d_q_forward.1} parent=31 // pred_check_branch
        %817 = sbr.rel (%p815) target = $region44
      $region43: #{conv2d_q_forward.1} parent=31 // pred_region
        %s818 = smul.u32 32, %s19
      $region44: #{conv2d_q_forward.1} parent=31 // pred_fallthru
        _
    $region32: #{conv2d_q_forward.1} parent=5 // pred_fallthru
      _
    %p819 = scmp.le.s32.totalorder 2, %s9
    // Predicated region
    $region45: #{conv2d_q_forward.1} parent=5 // pred_check
      %p820 = pneg %p819
    $region46: #{conv2d_q_forward.1} parent=5 // pred_check_branch
      %822 = sbr.rel (%p820) target = $region48
    $region47: #{conv2d_q_forward.1} parent=5 // pred_region
      %s823 = ssub.s32 %s9, 2
      // Predicated region
      $region49: #{conv2d_q_forward.1} parent=47 // pred_check
        %p824 = pneg %p141
      $region50: #{conv2d_q_forward.1} parent=47 // pred_check_branch
        %826 = sbr.rel (%p824) target = $region52
      $region51: #{conv2d_q_forward.1} parent=47 // pred_region
        %s827 = smul.u32 32, %s22
        %p828 = scmp.lt.s32.totalorder %s827, 63
        %s829 = scalar_select %p828, %s827, 63
        %p830 = scmp.lt.s32.totalorder %s23, 0
        %s831 = scalar_select %p830, %s23, 0
        %s832 = sadd.s32 %s831, %s829
        %s833 = smul.addr %s832, 8
        %s834 = scalar_lea.vmem %s3, %s833
      $region52: #{conv2d_q_forward.1} parent=47 // pred_fallthru
        _
    $region48: #{conv2d_q_forward.1} parent=5 // pred_fallthru
      _
  $region6: #{conv2d_q_forward.1} parent=0 // loop_footer
    %s13 = sadd.s32 1, %s9
  $region7: #{conv2d_q_forward.1} parent=0 // loop_footer_branch
    %8 = sbr.rel target = $region3
  $region8: #{conv2d_q_forward.1} parent=0 // loop_exit
    _

</llo_original>
